<compile_context>
chip_gen: v7x
topology: tpu7x:2x2x1
jax: 0.10.0
libtpu: 0.0.40
codegen_flags: <defaults>
</compile_context>

<pallas_src>
import jax
import jax.numpy as jnp
from jax.experimental import pallas as pl
from jax.experimental.pallas import tpu as pltpu


IMG_SIZE = 8
IN_FEATURES = IMG_SIZE * IMG_SIZE   # 64
HIDDEN = 200
OUT_FEATURES = 4                    # num_objects * 4 = 1 * 4

# Lane-dense padded sizes used inside the kernel.
HIDDEN_PAD = 256      # 200 -> 256: full MXU N / K, no ragged lanes for h
OUT_PAD_MXU = 128     # fc2 weights padded to one MXU column block; the result
                      # is sliced to 4 lanes BEFORE the epilogue & store.

MAX_BATCH_TILE = 1024     # ~86% of HBM roofline per measured tile sweeps
SINGLE_BLOCK_MAX = 256    # below this, grid/pipeline bookkeeping isn't worth it


def _mlp_kernel(x_ref, w1_ref, b1_ref, w2_ref, b2_ref, o_ref):
    cdt = w1_ref.dtype  # matmul operand dtype (f32 default, optionally bf16)
    # fc1 + ReLU (padded hidden columns have zero weight & bias -> relu(0)=0).
    x = x_ref[...].astype(cdt)
    h = jnp.dot(x, w1_ref[...], preferred_element_type=jnp.float32)
    h = jnp.maximum(h + b1_ref[...], 0.0)
    # fc2: full 128-wide MXU column block, then keep only the 4 real outputs.
    o_full = jnp.dot(h.astype(cdt), w2_ref[...],
                     preferred_element_type=jnp.float32)
    # Epilogue restricted to the 4 stored columns (bias + sigmoid on 4 lanes).
    o = o_full[:, :OUT_FEATURES] + b2_ref[...]
    o_ref[...] = jax.nn.sigmoid(o).astype(o_ref.dtype)


def pad_params(w1, b1, w2, b2, matmul_dtype=jnp.float32):
    """One-time transform to the kernel's canonical lane-dense layout.

    Call ONCE at init (not per forward). Weights are (in, out); transpose
    PyTorch nn.Linear weights ((out, in)) before calling. Biases stay f32
    (f32 epilogue) even when matmul_dtype is bf16.
    """
    w1p = jnp.zeros((IN_FEATURES, HIDDEN_PAD), matmul_dtype)
    w1p = w1p.at[:, :HIDDEN].set(w1.astype(matmul_dtype))
    b1p = jnp.zeros((1, HIDDEN_PAD), jnp.float32).at[0, :HIDDEN].set(b1)
    w2p = jnp.zeros((HIDDEN_PAD, OUT_PAD_MXU), matmul_dtype)
    w2p = w2p.at[:HIDDEN, :OUT_FEATURES].set(w2.astype(matmul_dtype))
    b2p = jnp.zeros((1, OUT_FEATURES), jnp.float32).at[0, :].set(b2)
    return w1p, b1p, w2p, b2p


def _cost_estimate(rows, w_dtype):
    wsz = jnp.dtype(w_dtype).itemsize
    w_elems = IN_FEATURES * HIDDEN_PAD + HIDDEN_PAD * OUT_PAD_MXU
    flops = 2 * rows * w_elems
    bytes_accessed = (4 * rows * IN_FEATURES          # x (f32 in HBM)
                      + 4 * rows * OUT_FEATURES       # compact output
                      + wsz * w_elems                 # weights (loaded once)
                      + 4 * (HIDDEN_PAD + OUT_FEATURES))  # biases
    return pl.CostEstimate(flops=flops,
                           transcendentals=rows * OUT_FEATURES,
                           bytes_accessed=bytes_accessed)


def _choose_batch_tile(B):
    """None -> single full-VMEM block (no grid). Otherwise a batch-tile size."""
    if B <= SINGLE_BLOCK_MAX:
        return None
    # At least two tiles so v7x can shard the "parallel" batch axis across both
    # TensorCores; capped at MAX_BATCH_TILE (amortizes ~0.35us/step overhead).
    half = ((-(-B // 2)) + 127) // 128 * 128
    return min(MAX_BATCH_TILE, half)


def net_forward(x, params):
    """x: (B, 64) f32, params: output of pad_params -> (B, 4) f32."""
    w1p, b1p, w2p, b2p = params
    B = x.shape[0]
    tile = _choose_batch_tile(B)

    if tile is None:
        # Tiny batch: single full-VMEM block, no grid / pipeline machinery.
        vmem = pl.BlockSpec(memory_space=pltpu.MemorySpace.VMEM)
        return pl.pallas_call(
            _mlp_kernel,
            out_shape=jax.ShapeDtypeStruct((B, OUT_FEATURES), jnp.float32),
            in_specs=[vmem] * 5,
            out_specs=vmem,
            cost_estimate=_cost_estimate(B, w1p.dtype),
        )(x, w1p, b1p, w2p, b2p)

    # Gridded path: batch tiles, weights VMEM-resident (constant index maps).
    # No jnp.pad of x: the ragged last block's OOB input rows read undefined
    # data but their output rows are clipped by Pallas, and there is no
    # cross-row reduction, so results are exact.
    n_tiles = pl.cdiv(B, tile)
    return pl.pallas_call(
        _mlp_kernel,
        out_shape=jax.ShapeDtypeStruct((B, OUT_FEATURES), jnp.float32),
        grid=(n_tiles,),
        in_specs=[
            pl.BlockSpec((tile, IN_FEATURES), lambda i: (i, 0)),
            pl.BlockSpec((IN_FEATURES, HIDDEN_PAD), lambda i: (0, 0)),
            pl.BlockSpec((1, HIDDEN_PAD), lambda i: (0, 0)),
            pl.BlockSpec((HIDDEN_PAD, OUT_PAD_MXU), lambda i: (0, 0)),
            pl.BlockSpec((1, OUT_FEATURES), lambda i: (0, 0)),
        ],
        out_specs=pl.BlockSpec((tile, OUT_FEATURES), lambda i: (i, 0)),
        compiler_params=pltpu.CompilerParams(
            dimension_semantics=("parallel",)),
        cost_estimate=_cost_estimate(n_tiles * tile, w1p.dtype),
    )(x, w1p, b1p, w2p, b2p)


def init_params(key):
    """Deterministic init mimicking PyTorch's default Linear init
    (uniform in +/- 1/sqrt(fan_in)). Weights stored as (in, out)."""
    k1, k2, k3, k4 = jax.random.split(key, 4)
    bound1 = 1.0 / jnp.sqrt(IN_FEATURES)
    bound2 = 1.0 / jnp.sqrt(HIDDEN)
    w1 = jax.random.uniform(k1, (IN_FEATURES, HIDDEN), jnp.float32, -bound1, bound1)
    b1 = jax.random.uniform(k2, (HIDDEN,), jnp.float32, -bound1, bound1)
    w2 = jax.random.uniform(k3, (HIDDEN, OUT_FEATURES), jnp.float32, -bound2, bound2)
    b2 = jax.random.uniform(k4, (OUT_FEATURES,), jnp.float32, -bound2, bound2)
    return w1, b1, w2, b2


def reference_forward(x, w1, b1, w2, b2):
    h = jnp.maximum(x @ w1 + b1, 0.0)
    return jax.nn.sigmoid(h @ w2 + b2)


if __name__ == "__main__":
    key = jax.random.PRNGKey(0)
    kx, kx2, kp = jax.random.split(key, 3)
    w1, b1, w2, b2 = init_params(kp)

    # Pad ONCE at init -- this is the canonical parameter format from here on.
    params_f32 = pad_params(w1, b1, w2, b2)

    forward = jax.jit(net_forward)

    # Small batch -> single-block (no grid) path.
    batch = 8
    x = jax.random.normal(kx, (batch, IN_FEATURES), jnp.float32)
    out = jax.block_until_ready(forward(x, params_f32))
    ref = reference_forward(x, w1, b1, w2, b2)
    assert out.shape == (batch, OUT_FEATURES), out.shape
    assert jnp.allclose(out, ref, atol=1e-5, rtol=1e-5), (
        float(jnp.max(jnp.abs(out - ref))))

    # Larger, non-multiple batch -> gridded path with resident weights and a
    # ragged (clipped) last tile.
    batch2 = 300
    x2 = jax.random.normal(kx2, (batch2, IN_FEATURES), jnp.float32)
    out2 = jax.block_until_ready(forward(x2, params_f32))
    ref2 = reference_forward(x2, w1, b1, w2, b2)
    assert out2.shape == (batch2, OUT_FEATURES), out2.shape
    assert jnp.allclose(out2, ref2, atol=1e-5, rtol=1e-5), (
        float(jnp.max(jnp.abs(out2 - ref2))))

    # Optional bf16-matmul variant (f32 accumulate + f32 epilogue): looser tol.
    params_bf16 = pad_params(w1, b1, w2, b2, matmul_dtype=jnp.bfloat16)
    out3 = jax.block_until_ready(forward(x2, params_bf16))
    assert out3.shape == (batch2, OUT_FEATURES), out3.shape
    assert jnp.allclose(out3, ref2, atol=3e-2, rtol=0), (
        float(jnp.max(jnp.abs(out3 - ref2))))

    print("KERNEL_OK")
</pallas_src>

<mosaic_0001>
module attributes {stable_mosaic.version = 11 : i64} {
  func.func @_mlp_kernel(%arg0: memref<8x64xf32, #tpu.memory_space<vmem>>, %arg1: memref<64x256xf32, #tpu.memory_space<vmem>>, %arg2: memref<1x256xf32, #tpu.memory_space<vmem>>, %arg3: memref<256x128xf32, #tpu.memory_space<vmem>>, %arg4: memref<1x4xf32, #tpu.memory_space<vmem>>, %arg5: memref<8x4xf32, #tpu.memory_space<vmem>>) attributes {dimension_semantics = [], scalar_prefetch = 0 : i64, scratch_operands = 0 : i64, tpu.core_type = #tpu.core_type<tc>} {
    %c0 = arith.constant 0 : index
    %c0_0 = arith.constant 0 : index
    %0 = vector.load %arg0[%c0, %c0_0] : memref<8x64xf32, #tpu.memory_space<vmem>>, vector<8x64xf32>
    %c0_1 = arith.constant 0 : index
    %c0_2 = arith.constant 0 : index
    %1 = vector.load %arg1[%c0_1, %c0_2] : memref<64x256xf32, #tpu.memory_space<vmem>>, vector<64x256xf32>
    %cst = arith.constant dense<0.000000e+00> : vector<8x256xf32>
    %2 = tpu.matmul %0, %1, %cst {dimension_numbers = #tpu.dot_dimension_numbers<[1], [0], [0], [1], [0, 0, 1, 1], [], []>} : vector<8x64xf32>, vector<64x256xf32>, vector<8x256xf32> -> vector<8x256xf32>
    %c0_3 = arith.constant 0 : index
    %c0_4 = arith.constant 0 : index
    %3 = vector.load %arg2[%c0_3, %c0_4] : memref<1x256xf32, #tpu.memory_space<vmem>>, vector<1x256xf32>
    %4 = vector.broadcast %3 : vector<1x256xf32> to vector<8x256xf32>
    %5 = arith.addf %2, %4 : vector<8x256xf32>
    %cst_5 = arith.constant 0.000000e+00 : f32
    %6 = vector.broadcast %cst_5 : f32 to vector<8x256xf32>
    %7 = arith.maximumf %5, %6 : vector<8x256xf32>
    %c0_6 = arith.constant 0 : index
    %c0_7 = arith.constant 0 : index
    %8 = vector.load %arg3[%c0_6, %c0_7] : memref<256x128xf32, #tpu.memory_space<vmem>>, vector<256x128xf32>
    %cst_8 = arith.constant dense<0.000000e+00> : vector<8x128xf32>
    %9 = tpu.matmul %7, %8, %cst_8 {dimension_numbers = #tpu.dot_dimension_numbers<[1], [0], [0], [1], [0, 0, 1, 1], [], []>} : vector<8x256xf32>, vector<256x128xf32>, vector<8x128xf32> -> vector<8x128xf32>
    %10 = vector.extract_strided_slice %9 {offsets = [0, 0], sizes = [8, 4], strides = [1, 1]} : vector<8x128xf32> to vector<8x4xf32>
    %c0_9 = arith.constant 0 : index
    %c0_10 = arith.constant 0 : index
    %11 = vector.load %arg4[%c0_9, %c0_10] : memref<1x4xf32, #tpu.memory_space<vmem>>, vector<1x4xf32>
    %12 = vector.broadcast %11 : vector<1x4xf32> to vector<8x4xf32>
    %13 = arith.addf %10, %12 : vector<8x4xf32>
    %14 = arith.negf %13 : vector<8x4xf32>
    %15 = math.exp %14 : vector<8x4xf32>
    %cst_11 = arith.constant 1.000000e+00 : f32
    %16 = vector.broadcast %cst_11 : f32 to vector<8x4xf32>
    %17 = arith.addf %16, %15 : vector<8x4xf32>
    %18 = arith.divf %16, %17 : vector<8x4xf32>
    %c0_12 = arith.constant 0 : index
    %c0_13 = arith.constant 0 : index
    %19 = vector.load %arg5[%c0_12, %c0_13] : memref<8x4xf32, #tpu.memory_space<vmem>>, vector<8x4xf32>
    tpu.vector_store %arg5[%c0_12, %c0_13], %18 {strides = array<i32>} : memref<8x4xf32, #tpu.memory_space<vmem>>, vector<8x4xf32>,
    return
  }
}

</mosaic_0001>

<llo_original>
// kernel: net_forward.1
$region0: #{net_forward.1}
  #allocation0 [shape = 'u32[]', space=smem, size = 0x4, offset = 0x4, fixed_abs, tag = 'smem constant byte address 0x4 - core index']
  #allocation1 [shape = 'u32[144,128]{1,0:T(1,128)}', space=vmem, size = 0x12000, scoped, tag = 'internal scratch']
  %s0 = inlined_call_operand.hbm [shape: f32[8,64], index: 0, kind: input, shape index: {}]
  %s1 = inlined_call_operand.hbm [shape: f32[64,256], index: 1, kind: input, shape index: {}]
  %s2 = inlined_call_operand.vmem [shape: f32[1,256], index: 2, kind: input, shape index: {}]
  %s3 = inlined_call_operand.hbm [shape: f32[256,128], index: 3, kind: input, shape index: {}]
  %s4 = inlined_call_operand.vmem [shape: f32[1,4], index: 4, kind: input, shape index: {}]
  %s5 = inlined_call_operand.vmem [shape: f32[8,4], index: 5, kind: output, shape index: {}]
  %s6 = sld [smem:[#allocation0]]
  $region42: #{net_forward.1} parent=0
    _
  %s8 = ssub.s32 1, %s6
  %s9 = scalar_select 0, %s8, %s6
  $region1: #{net_forward.1} parent=0
    #allocation2 [shape = 'u8[4096]{0}', space=vmem, size = 0x1000, scoped, tag = 'input window, operand 0, single buffered']
    #allocation3 [shape = 's32[1]{0}', space=sflag, size = 0x4, scoped, tag = 'scoped memory for net_forward.1']
    #allocation4 [shape = 'u8[65536]{0}', space=vmem, size = 0x10000, scoped, tag = 'input window, operand 1, single buffered']
    #allocation5 [shape = 's32[1]{0}', space=sflag, size = 0x4, scoped, tag = 'scoped memory for net_forward.1']
    #allocation6 [shape = 'u8[131072]{0}', space=vmem, size = 0x20000, scoped, tag = 'input window, operand 3, single buffered']
    %10 = vsyncpa [#allocation3], 0
    %11 = vsyncpa [#allocation5], 0
    // Predicated region
    $region2: #{net_forward.1} parent=1 // pred_check
      _
    $region3: #{net_forward.1} parent=1 // pred_check_branch
      %13 = sbr.rel (0) target = $region5
    $region4: #{net_forward.1} parent=1 // pred_region
      %s15 = ssub.s32 128, 128
      %16 = vsyncadd [#allocation3], %s15
      %s18 = sshll.u32 [#allocation2], 4
      %s19 = int_to_ptr.vmem [resolvable:$true] %s18
      %21 = dma.hbm_to_vmem [thread:$0]  %s0, 128, %s19, [#allocation3]
    $region5: #{net_forward.1} parent=1 // pred_fallthru
      _
    // Predicated region
    $region6: #{net_forward.1} parent=1 // pred_check
      _
    $region7: #{net_forward.1} parent=1 // pred_check_branch
      %23 = sbr.rel (0) target = $region9
    $region8: #{net_forward.1} parent=1 // pred_region
      %s25 = ssub.s32 2048, 2048
      %26 = vsyncadd [#allocation5], %s25
      %s27 = sshll.u32 [#allocation4], 4
      %s28 = int_to_ptr.vmem [resolvable:$true] %s27
      %33 = dma.hbm_to_vmem [thread:$0]  %s1, 2048, %s28, [#allocation5], 256, 256, 16
    $region9: #{net_forward.1} parent=1 // pred_fallthru
      _
    // Predicated region
    $region10: #{net_forward.1} parent=1 // pred_check
      _
    $region11: #{net_forward.1} parent=1 // pred_check_branch
      %35 = sbr.rel (0) target = $region13
    $region12: #{net_forward.1} parent=1 // pred_region
      _
    $region13: #{net_forward.1} parent=1 // pred_fallthru
      _
    // Predicated region
    $region14: #{net_forward.1} parent=1 // pred_check
      _
    $region15: #{net_forward.1} parent=1 // pred_check_branch
      %37 = sbr.rel (0) target = $region17
    $region16: #{net_forward.1} parent=1 // pred_region
      %s39 = ssub.s32 4096, 4096
      %40 = vsyncadd [#allocation5], %s39
      %s41 = sshll.u32 [#allocation6], 4
      %s42 = int_to_ptr.vmem [resolvable:$true] %s41
      %47 = dma.hbm_to_vmem [thread:$0]  %s3, 4096, %s42, [#allocation5], 128, 128, 8
    $region17: #{net_forward.1} parent=1 // pred_fallthru
      _
    // Predicated region
    $region18: #{net_forward.1} parent=1 // pred_check
      _
    $region19: #{net_forward.1} parent=1 // pred_check_branch
      %49 = sbr.rel (0) target = $region21
    $region20: #{net_forward.1} parent=1 // pred_region
      _
    $region21: #{net_forward.1} parent=1 // pred_fallthru
      _
    // Predicated region
    $region22: #{net_forward.1} parent=1 // pred_check
      _
    $region23: #{net_forward.1} parent=1 // pred_check_branch
      %51 = sbr.rel (0) target = $region25
    $region24: #{net_forward.1} parent=1 // pred_region
      %52 = dma.done [#allocation3], 128
    $region25: #{net_forward.1} parent=1 // pred_fallthru
      _
    // Predicated region
    $region26: #{net_forward.1} parent=1 // pred_check
      _
    $region27: #{net_forward.1} parent=1 // pred_check_branch
      %54 = sbr.rel (0) target = $region29
    $region28: #{net_forward.1} parent=1 // pred_region
      %55 = dma.done [#allocation5], 2048
    $region29: #{net_forward.1} parent=1 // pred_fallthru
      _
    // Predicated region
    $region30: #{net_forward.1} parent=1 // pred_check
      _
    $region31: #{net_forward.1} parent=1 // pred_check_branch
      %57 = sbr.rel (0) target = $region33
    $region32: #{net_forward.1} parent=1 // pred_region
      %58 = dma.done [#allocation5], 4096
    $region33: #{net_forward.1} parent=1 // pred_fallthru
      _
    %v59 = vld [vmem:[#allocation2] sm:$0xff]
    %v60 = vld [vmem:[#allocation4] sm:$0xff]
    %v61 = vld [vmem:[#allocation4 + $0x8] sm:$0xff]
    %v62 = vld [vmem:[#allocation4 + $0x10] sm:$0xff]
    %v63 = vld [vmem:[#allocation4 + $0x18] sm:$0xff]
    %v64 = vld [vmem:[#allocation4 + $0x20] sm:$0xff]
    %v65 = vld [vmem:[#allocation4 + $0x28] sm:$0xff]
    %v66 = vld [vmem:[#allocation4 + $0x30] sm:$0xff]
    %v67 = vld [vmem:[#allocation4 + $0x38] sm:$0xff]
    %v68 = vld [vmem:[#allocation4 + $0x40] sm:$0xff]
    %v69 = vld [vmem:[#allocation4 + $0x48] sm:$0xff]
    %v70 = vld [vmem:[#allocation4 + $0x50] sm:$0xff]
    %v71 = vld [vmem:[#allocation4 + $0x58] sm:$0xff]
    %v72 = vld [vmem:[#allocation4 + $0x60] sm:$0xff]
    %v73 = vld [vmem:[#allocation4 + $0x68] sm:$0xff]
    %v74 = vld [vmem:[#allocation4 + $0x70] sm:$0xff]
    %v75 = vld [vmem:[#allocation4 + $0x78] sm:$0xff]
    %v76 = vld [vmem:[%s2] sm:$0x3]
    %v78 = vlaneseq
    %v79 = vshrl.u32 %v78, 7
    %v80 = vsub.s32 0, %v79
    %v81 = vrot.slane %v76, %v80
    %v82 = vlaneseq
    %v83 = vshrl.u32 %v82, 7
    %v84 = vsub.s32 1, %v83
    %v85 = vrot.slane %v76, %v84
    %vm88 = vcmask 523264
    %v90 = vsel %vm88, %v59, 0
    %92 = vmatprep.subr.mxu0 %v61
    %93 = vmatpush1.msra.mxu0 %v60
    %94 = vmatprep.subr.mxu0 %v63
    %95 = vmatpush1.msra.mxu0 %v62
    %96 = vmatprep.subr.mxu0 %v65
    %97 = vmatpush1.msra.mxu0 %v64
    %98 = vmatprep.subr.mxu0 %v67
    %99 = vmatpush1.msra.mxu0 %v66
    %100 = vmatprep.subr.mxu0 %v69
    %101 = vmatpush1.msra.mxu0 %v68
    %102 = vmatprep.subr.mxu0 %v71
    %103 = vmatpush1.msra.mxu0 %v70
    %104 = vmatprep.subr.mxu0 %v73
    %105 = vmatpush1.msra.mxu0 %v72
    %106 = vmatprep.subr.mxu0 %v75
    %107 = vmatpush1.msra.mxu0 %v74
    %108 = vmatprep.subr.mxu0 0.0
    %109 = vmatpush1.msra.mxu0 0.0
    %110 = vmatprep.subr.mxu0 0.0
    %111 = vmatpush1.msra.mxu0 0.0
    %112 = vmatprep.subr.mxu0 0.0
    %113 = vmatpush1.msra.mxu0 0.0
    %114 = vmatprep.subr.mxu0 0.0
    %115 = vmatpush1.msra.mxu0 0.0
    %116 = vmatprep.subr.mxu0 0.0
    %117 = vmatpush1.msra.mxu0 0.0
    %118 = vmatprep.subr.mxu0 0.0
    %119 = vmatpush1.msra.mxu0 0.0
    %120 = vmatprep.subr.mxu0 0.0
    %121 = vmatpush1.msra.mxu0 0.0
    %122 = vmatprep.subr.mxu0 0.0
    %123 = vmatpush1.msra.mxu0 0.0
    %124 = vmatprep.subr.mxu0 0.0
    %125 = vmatpush1.msra.mxu0 0.0
    %126 = vmatprep.subr.mxu0 0.0
    %127 = vmatpush1.msra.mxu0 0.0
    %128 = vmatprep.subr.mxu0 0.0
    %129 = vmatpush1.msra.mxu0 0.0
    %130 = vmatprep.subr.mxu0 0.0
    %131 = vmatpush1.msra.mxu0 0.0
    %132 = vmatprep.subr.mxu0 0.0
    %133 = vmatpush1.msra.mxu0 0.0
    %134 = vmatprep.subr.mxu0 0.0
    %135 = vmatpush1.msra.mxu0 0.0
    %136 = vmatprep.subr.mxu0 0.0
    %137 = vmatpush1.msra.mxu0 0.0
    %138 = vmatprep.subr.mxu0 0.0
    %139 = vmatpush1.msra.mxu0 0.0
    %140 = vmatprep.subr.mxu0 0.0
    %141 = vmatpush1.msra.mxu0 0.0
    %142 = vmatprep.subr.mxu0 0.0
    %143 = vmatpush1.msra.mxu0 0.0
    %144 = vmatprep.subr.mxu0 0.0
    %145 = vmatpush1.msra.mxu0 0.0
    %146 = vmatprep.subr.mxu0 0.0
    %147 = vmatpush1.msra.mxu0 0.0
    %148 = vmatprep.subr.mxu0 0.0
    %149 = vmatpush1.msra.mxu0 0.0
    %150 = vmatprep.subr.mxu0 0.0
    %151 = vmatpush1.msra.mxu0 0.0
    %152 = vmatprep.subr.mxu0 0.0
    %153 = vmatpush1.msra.mxu0 0.0
    %154 = vmatprep.subr.mxu0 0.0
    %155 = vmatpush1.msra.mxu0 0.0
    %156 = vmatprep.mubr.f32.mxu0 0.0
    %157 = vmatmul.mubr.f32.gmra.mrb[0].mxu0 %v90
    %v158 = vpop.f32.mrb[0].mxu0
    %v159 = vadd.f32 %v81, %v158
    %v160 = vpop.f32.mrb[0].mxu0
    %v161 = vadd.f32 %v85, %v160
    %162 = vdwg.mxu0
    %v163 = vmax.f32 %v159, 0.0
    %v164 = vmax.f32 %v161, 0.0
    %v165 = vld [vmem:[#allocation6] sm:$0xff]
    %v166 = vld [vmem:[#allocation6 + $0x8] sm:$0xff]
    %v167 = vld [vmem:[#allocation6 + $0x10] sm:$0xff]
    %v168 = vld [vmem:[#allocation6 + $0x18] sm:$0xff]
    %v169 = vld [vmem:[#allocation6 + $0x20] sm:$0xff]
    %v170 = vld [vmem:[#allocation6 + $0x28] sm:$0xff]
    %v171 = vld [vmem:[#allocation6 + $0x30] sm:$0xff]
    %v172 = vld [vmem:[#allocation6 + $0x38] sm:$0xff]
    %v173 = vld [vmem:[#allocation6 + $0x40] sm:$0xff]
    %v174 = vld [vmem:[#allocation6 + $0x48] sm:$0xff]
    %v175 = vld [vmem:[#allocation6 + $0x50] sm:$0xff]
    %v176 = vld [vmem:[#allocation6 + $0x58] sm:$0xff]
    %v177 = vld [vmem:[#allocation6 + $0x60] sm:$0xff]
    %v178 = vld [vmem:[#allocation6 + $0x68] sm:$0xff]
    %v179 = vld [vmem:[#allocation6 + $0x70] sm:$0xff]
    %v180 = vld [vmem:[#allocation6 + $0x78] sm:$0xff]
    %v181 = vld [vmem:[#allocation6 + $0x80] sm:$0xff]
    %v182 = vld [vmem:[#allocation6 + $0x88] sm:$0xff]
    %v183 = vld [vmem:[#allocation6 + $0x90] sm:$0xff]
    %v184 = vld [vmem:[#allocation6 + $0x98] sm:$0xff]
    %v185 = vld [vmem:[#allocation6 + $0xa0] sm:$0xff]
    %v186 = vld [vmem:[#allocation6 + $0xa8] sm:$0xff]
    %v187 = vld [vmem:[#allocation6 + $0xb0] sm:$0xff]
    %v188 = vld [vmem:[#allocation6 + $0xb8] sm:$0xff]
    %v189 = vld [vmem:[#allocation6 + $0xc0] sm:$0xff]
    %v190 = vld [vmem:[#allocation6 + $0xc8] sm:$0xff]
    %v191 = vld [vmem:[#allocation6 + $0xd0] sm:$0xff]
    %v192 = vld [vmem:[#allocation6 + $0xd8] sm:$0xff]
    %v193 = vld [vmem:[#allocation6 + $0xe0] sm:$0xff]
    %v194 = vld [vmem:[#allocation6 + $0xe8] sm:$0xff]
    %v195 = vld [vmem:[#allocation6 + $0xf0] sm:$0xff]
    %v196 = vld [vmem:[#allocation6 + $0xf8] sm:$0xff]
    %197 = vmatprep.subr.mxu0 0.0
    %198 = vmatpush1.msra.mxu0 %v165
    %199 = vmatprep.subr.mxu0 0.0
    %200 = vmatpush1.msra.mxu0 %v166
    %201 = vmatprep.subr.mxu0 0.0
    %202 = vmatpush1.msra.mxu0 %v167
    %203 = vmatprep.subr.mxu0 0.0
    %204 = vmatpush1.msra.mxu0 %v168
    %205 = vmatprep.subr.mxu0 0.0
    %206 = vmatpush1.msra.mxu0 %v169
    %207 = vmatprep.subr.mxu0 0.0
    %208 = vmatpush1.msra.mxu0 %v170
    %209 = vmatprep.subr.mxu0 0.0
    %210 = vmatpush1.msra.mxu0 %v171
    %211 = vmatprep.subr.mxu0 0.0
    %212 = vmatpush1.msra.mxu0 %v172
    %213 = vmatprep.subr.mxu0 0.0
    %214 = vmatpush1.msra.mxu0 %v173
    %215 = vmatprep.subr.mxu0 0.0
    %216 = vmatpush1.msra.mxu0 %v174
    %217 = vmatprep.subr.mxu0 0.0
    %218 = vmatpush1.msra.mxu0 %v175
    %219 = vmatprep.subr.mxu0 0.0
    %220 = vmatpush1.msra.mxu0 %v176
    %221 = vmatprep.subr.mxu0 0.0
    %222 = vmatpush1.msra.mxu0 %v177
    %223 = vmatprep.subr.mxu0 0.0
    %224 = vmatpush1.msra.mxu0 %v178
    %225 = vmatprep.subr.mxu0 0.0
    %226 = vmatpush1.msra.mxu0 %v179
    %227 = vmatprep.subr.mxu0 0.0
    %228 = vmatpush1.msra.mxu0 %v180
    %229 = vmatprep.subr.mxu0 0.0
    %230 = vmatpush1.msra.mxu0 %v181
    %231 = vmatprep.subr.mxu0 0.0
    %232 = vmatpush1.msra.mxu0 %v182
    %233 = vmatprep.subr.mxu0 0.0
    %234 = vmatpush1.msra.mxu0 %v183
    %235 = vmatprep.subr.mxu0 0.0
    %236 = vmatpush1.msra.mxu0 %v184
    %237 = vmatprep.subr.mxu0 0.0
    %238 = vmatpush1.msra.mxu0 %v185
    %239 = vmatprep.subr.mxu0 0.0
    %240 = vmatpush1.msra.mxu0 %v186
    %241 = vmatprep.subr.mxu0 0.0
    %242 = vmatpush1.msra.mxu0 %v187
    %243 = vmatprep.subr.mxu0 0.0
    %244 = vmatpush1.msra.mxu0 %v188
    %245 = vmatprep.subr.mxu0 0.0
    %246 = vmatpush1.msra.mxu0 %v189
    %247 = vmatprep.subr.mxu0 0.0
    %248 = vmatpush1.msra.mxu0 %v190
    %249 = vmatprep.subr.mxu0 0.0
    %250 = vmatpush1.msra.mxu0 %v191
    %251 = vmatprep.subr.mxu0 0.0
    %252 = vmatpush1.msra.mxu0 %v192
    %253 = vmatprep.subr.mxu0 0.0
    %254 = vmatpush1.msra.mxu0 %v193
    %255 = vmatprep.subr.mxu0 0.0
    %256 = vmatpush1.msra.mxu0 %v194
    %257 = vmatprep.subr.mxu0 0.0
    %258 = vmatpush1.msra.mxu0 %v195
    %259 = vmatprep.subr.mxu0 0.0
    %260 = vmatpush1.msra.mxu0 %v196
    %261 = vmatprep.mubr.f32.mxu0 %v164
    %262 = vmatmul.mubr.f32.gmra.mrb[0].mxu0 %v163
    %v263 = vpop.f32.mrb[0].mxu0
    %v264 = vadd.f32 0.0, %v263
    %v265 = vpop.f32.mrb[0].mxu0
    %266 = vdwg.mxu0
    %v267 = vld [vmem:[%s4] sm:$0x1]
    %v269 = vlaneseq
    %v270 = vshrl.u32 %v269, 7
    %v271 = vsub.s32 0, %v270
    %v272 = vrot.slane %v267, %v271
    %v274 = vadd.f32 %v264, %v272
    %v275 = vxor.u32 %v274, 2147483648
    %v276 = vmul.f32 %v275, 1.442695
    %v277 = vpow.pop %v276
    %v278 = vadd.f32 %v277, 1.0
    %v279 = vrcp.pop %v278
    %v280 = vmul.f32 1.0, %v279
    %vm281 = vcmask 31744
    %282 = vst.msk [vmem:[%s5] sm:$0xff] %vm281, %v280
    // Predicated region
    $region34: #{net_forward.1} parent=1 // pred_check
      _
    $region35: #{net_forward.1} parent=1 // pred_check_branch
      %284 = sbr.rel (0) target = $region37
    $region36: #{net_forward.1} parent=1 // pred_region
      _
    $region37: #{net_forward.1} parent=1 // pred_fallthru
      _
    // Predicated region
    $region38: #{net_forward.1} parent=1 // pred_check
      _
    $region39: #{net_forward.1} parent=1 // pred_check_branch
      %286 = sbr.rel (0) target = $region41
    $region40: #{net_forward.1} parent=1 // pred_region
      _
    $region41: #{net_forward.1} parent=1 // pred_fallthru
      _
    %287 = vsyncpa [#allocation3], 1
    %288 = vsyncpa [#allocation5], 1

</llo_original>
